<compile_context>
chip_gen: v7x
topology: tpu7x:2x2x1
jax: 0.10.0
libtpu: 0.0.40
codegen_flags: <defaults>
</compile_context>

<pallas_src>
import functools

import jax
import jax.numpy as jnp
from jax.experimental import pallas as pl
from jax.experimental.pallas import tpu as pltpu

LANES = 128


def _tpu_defaults():
    """Generation-aware (max_tile_rows, num_splits, vmem_limit_bytes)."""
    kind = ""
    try:
        kind = jax.devices()[0].device_kind.lower()
    except Exception:
        pass
    if ("v7" in kind) or ("7x" in kind):
        # 2 TensorCores/chip, 3.2 TB/s HBM, 64 MiB VMEM/TC.
        return 16384, 2, 48 * 1024 * 1024
    # Single-TensorCore chips (v5e / v6e / ...): split buys nothing.
    return 8192, 1, 40 * 1024 * 1024


def _sublane_multiple(dtype):
    itemsize = jnp.dtype(dtype).itemsize
    if itemsize >= 4:
        return 8
    if itemsize == 2:
        return 16
    return 32


def _dice_kernel(x_ref, t_ref, out_ref, acc_inter, acc_total, *,
                 rows, tile_rows, blocks_per_split, need_mask):
    """Accumulate per-split partial sums; write (intersection, sum(x+t))."""
    j = pl.program_id(1)

    @pl.when(j == 0)
    def _init():
        acc_inter[...] = jnp.zeros_like(acc_inter)
        acc_total[...] = jnp.zeros_like(acc_total)

    def accumulate(valid_rows):
        x = x_ref[...].astype(jnp.float32)
        t = t_ref[...].astype(jnp.float32)
        if valid_rows is not None:
            row_ids = jax.lax.broadcasted_iota(jnp.int32, (tile_rows, LANES), 0)
            keep = row_ids < valid_rows
            x = jnp.where(keep, x, 0.0)
            t = jnp.where(keep, t, 0.0)
        # Cheap axis-0 (sublane) fold into (1, 128); the expensive cross-lane
        # reduce happens exactly once per split in the finalize block.
        acc_inter[...] += jnp.sum(x * t, axis=0, keepdims=True)
        acc_total[...] += jnp.sum(x + t, axis=0, keepdims=True)

    if need_mask:
        s = pl.program_id(0)
        row0 = (s * blocks_per_split + j) * tile_rows
        limit = rows - row0

        # Fast path: the vast majority of steps carry no mask VALU work.
        @pl.when(limit >= tile_rows)
        def _full_block():
            accumulate(None)

        # Ragged last block: mask rows past the real array (sum-neutral).
        @pl.when(jnp.logical_and(limit > 0, limit < tile_rows))
        def _ragged_block():
            accumulate(limit)
        # limit <= 0: clamped duplicate block of the last split -> skip.
    else:
        accumulate(None)

    @pl.when(j == pl.num_programs(1) - 1)
    def _finalize():
        out_ref[0, 0] = jnp.sum(acc_inter[...])   # intersection partial
        out_ref[0, 1] = jnp.sum(acc_total[...])   # sum(x) + sum(t) partial


def dice_loss(inputs, targets, smooth=1e-6, *, max_tile_rows=None,
              num_splits=None):
    """Dice loss matching the PyTorch DiceLoss.forward semantics."""
    assert inputs.shape == targets.shape, "inputs/targets must match in size"
    def_tile, def_splits, vmem_limit = _tpu_defaults()
    if max_tile_rows is None:
        max_tile_rows = def_tile
    if num_splits is None:
        num_splits = def_splits

    x = inputs.reshape(-1)
    t = targets.reshape(-1)
    if x.dtype == jnp.bool_:
        x = x.astype(jnp.int8)
    if t.dtype == jnp.bool_:
        t = t.astype(jnp.int8)

    n = x.shape[0]
    smooth = jnp.float32(smooth)

    # Non-128-aligned tail (<=127 elements): reduce in plain JAX, no pad copy.
    rem = n % LANES
    n_main = n - rem
    if rem:
        x_tail = x[n_main:].astype(jnp.float32)
        t_tail = t[n_main:].astype(jnp.float32)
        tail_inter = jnp.sum(x_tail * t_tail)
        tail_total = jnp.sum(x_tail) + jnp.sum(t_tail)
    else:
        tail_inter = jnp.float32(0.0)
        tail_total = jnp.float32(0.0)

    rows = n_main // LANES
    if rows == 0:
        # Fewer than 128 elements: the tail reduction is the whole answer.
        return (1.0 - (2.0 * tail_inter + smooth)
                / (tail_total + smooth)).astype(jnp.float32)

    x2d = x[:n_main].reshape(rows, LANES)
    t2d = t[:n_main].reshape(rows, LANES)

    # Tile sizing: split rows across num_splits, round up to the strictest
    # sublane-packing multiple of the operand dtypes, cap at max_tile_rows,
    # never exceed the array itself (full-extent block is always legal).
    row_mult = max(_sublane_multiple(x2d.dtype), _sublane_multiple(t2d.dtype))
    tile_rows = -(-rows // num_splits)
    tile_rows = -(-tile_rows // row_mult) * row_mult
    tile_rows = min(tile_rows, max_tile_rows)
    tile_rows = min(tile_rows, rows)

    total_blocks = -(-rows // tile_rows)
    blocks_per_split = -(-total_blocks // num_splits)
    need_mask = (rows % tile_rows != 0) or \
                (blocks_per_split * num_splits != total_blocks)

    def in_map(s, j):
        # Clamp so out-of-range blocks (last split) re-read a valid block;
        # their contribution is skipped/masked to zero inside the kernel.
        b = jnp.minimum(s * blocks_per_split + j, total_blocks - 1)
        return (b, 0)

    kernel = functools.partial(
        _dice_kernel, rows=rows, tile_rows=tile_rows,
        blocks_per_split=blocks_per_split, need_mask=need_mask)

    partials = pl.pallas_call(
        kernel,
        out_shape=jax.ShapeDtypeStruct((num_splits, 2), jnp.float32),
        grid_spec=pltpu.PrefetchScalarGridSpec(
            num_scalar_prefetch=0,
            grid=(num_splits, blocks_per_split),
            in_specs=[
                pl.BlockSpec((tile_rows, LANES), in_map),
                pl.BlockSpec((tile_rows, LANES), in_map),
            ],
            out_specs=pl.BlockSpec((1, 2), lambda s, j: (s, 0),
                                   memory_space=pltpu.SMEM),
            scratch_shapes=[
                pltpu.VMEM((1, LANES), jnp.float32),   # intersection acc
                pltpu.VMEM((1, LANES), jnp.float32),   # sum(x)+sum(t) acc
            ],
        ),
        compiler_params=pltpu.CompilerParams(
            dimension_semantics=("parallel", "arbitrary"),
            vmem_limit_bytes=vmem_limit,
        ),
    )(x2d, t2d)

    inter = jnp.sum(partials[:, 0]) + tail_inter
    total = jnp.sum(partials[:, 1]) + tail_total
    return (1.0 - (2.0 * inter + smooth) / (total + smooth)).astype(jnp.float32)


def _ref_dice(x, t, smooth=1e-6):
    xf = x.reshape(-1).astype(jnp.float32)
    tf = t.reshape(-1).astype(jnp.float32)
    inter = jnp.sum(xf * tf)
    return 1.0 - (2.0 * inter + smooth) / (jnp.sum(xf) + jnp.sum(tf) + smooth)


if __name__ == "__main__":
    key = jax.random.PRNGKey(0)
    k1, k2 = jax.random.split(key)

    # Small NCHW-like shape: sigmoid predictions vs. binary targets.
    shape = (2, 4, 16, 16)
    inputs = jax.nn.sigmoid(jax.random.normal(k1, shape, dtype=jnp.float32))
    targets = (jax.random.uniform(k2, shape) > 0.5).astype(jnp.float32)

    loss = jax.block_until_ready(dice_loss(inputs, targets))
    ref = _ref_dice(inputs, targets)
    assert jnp.allclose(loss, ref, atol=1e-5, rtol=1e-5), (loss, ref)

    # Extra checks: JAX-tail (non-128-multiple), pure-tail (<128 elems),
    # narrow-dtype streaming (bf16 preds + int8 targets), and a forced
    # multi-block / ragged-block / clamped-duplicate-block configuration.
    checks = [
        ((7, 500), jnp.float32, jnp.float32, None, None),
        ((3, 5, 7), jnp.float32, jnp.float32, None, None),
        ((2, 8, 32, 32), jnp.bfloat16, jnp.int8, None, None),
        ((3, 1000, 128), jnp.float32, jnp.float32, 1024, 2),
    ]
    for i, (shp, xdt, tdt, mtr, ns) in enumerate(checks):
        ka, kb = jax.random.split(jax.random.PRNGKey(i + 1))
        xi = jax.nn.sigmoid(jax.random.normal(ka, shp, dtype=jnp.float32)).astype(xdt)
        ti = (jax.random.uniform(kb, shp) > 0.5).astype(tdt)
        got = jax.block_until_ready(
            dice_loss(xi, ti, max_tile_rows=mtr, num_splits=ns))
        want = _ref_dice(xi, ti)
        assert jnp.allclose(got, want, atol=1e-4, rtol=1e-4), (shp, got, want)

    print("KERNEL_OK")
</pallas_src>

<mosaic_0001>
module attributes {stable_mosaic.version = 11 : i64} {
  func.func @_dice_kernel(%arg0: i32, %arg1: i32, %arg2: memref<16x128xf32, #tpu.memory_space<vmem>>, %arg3: memref<16x128xf32, #tpu.memory_space<vmem>>, %arg4: memref<1x2xf32, #tpu.memory_space<smem>>, %arg5: memref<1x128xf32, #tpu.memory_space<vmem>>, %arg6: memref<1x128xf32, #tpu.memory_space<vmem>>) attributes {dimension_semantics = [#tpu.dimension_semantics<parallel>, #tpu.dimension_semantics<arbitrary>], iteration_bounds = array<i64: 1, 1>, scalar_prefetch = 0 : i64, scratch_operands = 2 : i64, tpu.core_type = #tpu.core_type<tc>, window_params = [{transform_indices = @transform_0, window_bounds = array<i64: 16, 128>}, {transform_indices = @transform_1, window_bounds = array<i64: 16, 128>}, {transform_indices = @transform_2, window_bounds = array<i64: 1, 2>}]} {
    %c0_i32 = arith.constant 0 : i32
    %0 = arith.cmpi eq, %arg1, %c0_i32 : i32
    %1 = arith.extui %0 : i1 to i32
    %c0_i32_0 = arith.constant 0 : i32
    %2 = arith.cmpi ne, %1, %c0_i32_0 : i32
    scf.if %2 {
      %cst_15 = arith.constant 0.000000e+00 : f32
      %20 = vector.broadcast %cst_15 : f32 to vector<1x128xf32>
      %c0_16 = arith.constant 0 : index
      %c0_17 = arith.constant 0 : index
      %21 = vector.load %arg5[%c0_16, %c0_17] : memref<1x128xf32, #tpu.memory_space<vmem>>, vector<1x128xf32>
      tpu.vector_store %arg5[%c0_16, %c0_17], %20 {strides = array<i32>} : memref<1x128xf32, #tpu.memory_space<vmem>>, vector<1x128xf32>,
      %cst_18 = arith.constant 0.000000e+00 : f32
      %22 = vector.broadcast %cst_18 : f32 to vector<1x128xf32>
      %c0_19 = arith.constant 0 : index
      %c0_20 = arith.constant 0 : index
      %23 = vector.load %arg6[%c0_19, %c0_20] : memref<1x128xf32, #tpu.memory_space<vmem>>, vector<1x128xf32>
      tpu.vector_store %arg6[%c0_19, %c0_20], %22 {strides = array<i32>} : memref<1x128xf32, #tpu.memory_space<vmem>>, vector<1x128xf32>,
    } else {
    }
    %c0 = arith.constant 0 : index
    %c0_1 = arith.constant 0 : index
    %3 = vector.load %arg2[%c0, %c0_1] : memref<16x128xf32, #tpu.memory_space<vmem>>, vector<16x128xf32>
    %c0_2 = arith.constant 0 : index
    %c0_3 = arith.constant 0 : index
    %4 = vector.load %arg3[%c0_2, %c0_3] : memref<16x128xf32, #tpu.memory_space<vmem>>, vector<16x128xf32>
    %c0_4 = arith.constant 0 : index
    %c0_5 = arith.constant 0 : index
    %5 = vector.load %arg5[%c0_4, %c0_5] : memref<1x128xf32, #tpu.memory_space<vmem>>, vector<1x128xf32>
    %6 = arith.mulf %3, %4 : vector<16x128xf32>
    %cst = arith.constant dense<0.000000e+00> : vector<128xf32>
    %7 = vector.multi_reduction <add>, %6, %cst [0] : vector<16x128xf32> to vector<128xf32>
    %8 = vector.shape_cast %7 : vector<128xf32> to vector<1x128xf32>
    %9 = arith.addf %5, %8 : vector<1x128xf32>
    %c0_6 = arith.constant 0 : index
    %c0_7 = arith.constant 0 : index
    %10 = vector.load %arg5[%c0_6, %c0_7] : memref<1x128xf32, #tpu.memory_space<vmem>>, vector<1x128xf32>
    tpu.vector_store %arg5[%c0_6, %c0_7], %9 {strides = array<i32>} : memref<1x128xf32, #tpu.memory_space<vmem>>, vector<1x128xf32>,
    %c0_8 = arith.constant 0 : index
    %c0_9 = arith.constant 0 : index
    %11 = vector.load %arg6[%c0_8, %c0_9] : memref<1x128xf32, #tpu.memory_space<vmem>>, vector<1x128xf32>
    %12 = arith.addf %3, %4 : vector<16x128xf32>
    %cst_10 = arith.constant dense<0.000000e+00> : vector<128xf32>
    %13 = vector.multi_reduction <add>, %12, %cst_10 [0] : vector<16x128xf32> to vector<128xf32>
    %14 = vector.shape_cast %13 : vector<128xf32> to vector<1x128xf32>
    %15 = arith.addf %11, %14 : vector<1x128xf32>
    %c0_11 = arith.constant 0 : index
    %c0_12 = arith.constant 0 : index
    %16 = vector.load %arg6[%c0_11, %c0_12] : memref<1x128xf32, #tpu.memory_space<vmem>>, vector<1x128xf32>
    tpu.vector_store %arg6[%c0_11, %c0_12], %15 {strides = array<i32>} : memref<1x128xf32, #tpu.memory_space<vmem>>, vector<1x128xf32>,
    %c0_i32_13 = arith.constant 0 : i32
    %17 = arith.cmpi eq, %arg1, %c0_i32_13 : i32
    %18 = arith.extui %17 : i1 to i32
    %c0_i32_14 = arith.constant 0 : i32
    %19 = arith.cmpi ne, %18, %c0_i32_14 : i32
    scf.if %19 {
      %c0_15 = arith.constant 0 : index
      %c0_16 = arith.constant 0 : index
      %20 = vector.load %arg5[%c0_15, %c0_16] : memref<1x128xf32, #tpu.memory_space<vmem>>, vector<1x128xf32>
      %21 = vector.shape_cast %20 : vector<1x128xf32> to vector<1x1x128xf32>
      %cst_17 = arith.constant dense<0.000000e+00> : vector<1xf32>
      %22 = vector.multi_reduction <add>, %21, %cst_17 [1, 2] : vector<1x1x128xf32> to vector<1xf32>
      %23 = vector.shape_cast %22 : vector<1xf32> to vector<1x1x1xf32>
      %24 = vector.extract %23[0, 0, 0] : f32 from vector<1x1x1xf32>
      %c0_18 = arith.constant 0 : index
      %c0_19 = arith.constant 0 : index
      %25 = memref.load %arg4[%c0_18, %c0_19] : memref<1x2xf32, #tpu.memory_space<smem>>
      memref.store %24, %arg4[%c0_18, %c0_19] : memref<1x2xf32, #tpu.memory_space<smem>>
      %c0_20 = arith.constant 0 : index
      %c0_21 = arith.constant 0 : index
      %26 = vector.load %arg6[%c0_20, %c0_21] : memref<1x128xf32, #tpu.memory_space<vmem>>, vector<1x128xf32>
      %27 = vector.shape_cast %26 : vector<1x128xf32> to vector<1x1x128xf32>
      %cst_22 = arith.constant dense<0.000000e+00> : vector<1xf32>
      %28 = vector.multi_reduction <add>, %27, %cst_22 [1, 2] : vector<1x1x128xf32> to vector<1xf32>
      %29 = vector.shape_cast %28 : vector<1xf32> to vector<1x1x1xf32>
      %30 = vector.extract %29[0, 0, 0] : f32 from vector<1x1x1xf32>
      %c0_23 = arith.constant 0 : index
      %c1 = arith.constant 1 : index
      %31 = memref.load %arg4[%c0_23, %c1] : memref<1x2xf32, #tpu.memory_space<smem>>
      memref.store %30, %arg4[%c0_23, %c1] : memref<1x2xf32, #tpu.memory_space<smem>>
    } else {
    }
    return
  }
  func.func @transform_0(%arg0: i32, %arg1: i32) -> (i32, i32) {
    %c1_i32 = arith.constant 1 : i32
    %0 = arith.muli %arg0, %c1_i32 : i32
    %1 = arith.addi %0, %arg1 : i32
    %c0_i32 = arith.constant 0 : i32
    %2 = arith.minsi %1, %c0_i32 : i32
    %c0_i32_0 = arith.constant 0 : i32
    %c0_i32_1 = arith.constant 0 : i32
    return %2, %c0_i32_0 : i32, i32
  }
  func.func @transform_1(%arg0: i32, %arg1: i32) -> (i32, i32) {
    %c1_i32 = arith.constant 1 : i32
    %0 = arith.muli %arg0, %c1_i32 : i32
    %1 = arith.addi %0, %arg1 : i32
    %c0_i32 = arith.constant 0 : i32
    %2 = arith.minsi %1, %c0_i32 : i32
    %c0_i32_0 = arith.constant 0 : i32
    %c0_i32_1 = arith.constant 0 : i32
    return %2, %c0_i32_0 : i32, i32
  }
  func.func @transform_2(%arg0: i32, %arg1: i32) -> (i32, i32) {
    %c0_i32 = arith.constant 0 : i32
    %c0_i32_0 = arith.constant 0 : i32
    return %arg0, %c0_i32 : i32, i32
  }
}

</mosaic_0001>

<llo_original>
// kernel: tpu_custom_call.1
$region0: #{tpu_custom_call.1}
  #allocation0 [shape = 'u32[]', space=smem, size = 0x4, offset = 0x4, fixed_abs, tag = 'smem constant byte address 0x4 - core index']
  #allocation1 [shape = 'u32[144,128]{1,0:T(1,128)}', space=vmem, size = 0x12000, scoped, tag = 'internal scratch']
  #allocation2 [shape = 'f32[1,128]{1,0:T(1,128)}', space=vmem, size = 0x200, scoped, tag = 'scratch operand']
  #allocation3 [shape = 'f32[1,128]{1,0:T(1,128)}', space=vmem, size = 0x200, scoped, tag = 'scratch operand']
  %s0 = inlined_call_operand.hbm [shape: f32[16,128], index: 0, kind: input, shape index: {}]
  %s1 = inlined_call_operand.hbm [shape: f32[16,128], index: 1, kind: input, shape index: {}]
  %s2 = inlined_call_operand.hbm [shape: f32[1,2], index: 2, kind: output, shape index: {}]
  %s3 = sld [smem:[#allocation0]]
  $region34: #{tpu_custom_call.1} parent=0
    _
  %s5 = ssub.s32 1, %s3
  %s6 = scalar_select 0, %s5, %s3
  $region1: #{tpu_custom_call.1} parent=0
    #allocation4 [shape = 'u8[8192]{0}', space=vmem, size = 0x2000, scoped, tag = 'input window, operand 0, single buffered']
    #allocation5 [shape = 's32[1]{0}', space=sflag, size = 0x4, scoped, tag = 'scoped memory for tpu_custom_call.1']
    #allocation6 [shape = 's32[1]{0}', space=sflag, size = 0x4, scoped, tag = 'scoped memory for tpu_custom_call.1']
    #allocation7 [shape = 'u8[8192]{0}', space=vmem, size = 0x2000, scoped, tag = 'input window, operand 1, single buffered']
    #allocation8 [shape = 's32[1]{0}', space=sflag, size = 0x4, scoped, tag = 'scoped memory for tpu_custom_call.1']
    #allocation9 [shape = 'u8[512]{0}', space=smem, size = 0x200, scoped, tag = 'output window, operand 0, single buffered']
    %7 = vsyncpa [#allocation5], 0
    %8 = vsyncpa [#allocation8], 0
    %9 = vsyncpa [#allocation6], 0
    // Predicated region
    $region2: #{tpu_custom_call.1} parent=1 // pred_check
      _
    $region3: #{tpu_custom_call.1} parent=1 // pred_check_branch
      %11 = sbr.rel (0) target = $region5
    $region4: #{tpu_custom_call.1} parent=1 // pred_region
      %s12 = sadd.s32 0, 0
      %p13 = scmp.lt.s32.totalorder %s12, 0
      %s14 = scalar_select %p13, %s12, 0
      %s15 = smul.u32 2, %s14
      %s17 = ssub.s32 256, 256
      %18 = vsyncadd [#allocation5], %s17
      %s19 = smul.addr %s15, 128
      %s20 = scalar_lea.hbm %s0, %s19
      %s21 = sshll.u32 [#allocation4], 4
      %s22 = int_to_ptr.vmem [resolvable:$true] %s21
      %27 = dma.hbm_to_vmem [thread:$0]  %s20, 256, %s22, [#allocation5], 128, 128, 8
    $region5: #{tpu_custom_call.1} parent=1 // pred_fallthru
      _
    // Predicated region
    $region6: #{tpu_custom_call.1} parent=1 // pred_check
      _
    $region7: #{tpu_custom_call.1} parent=1 // pred_check_branch
      %29 = sbr.rel (0) target = $region9
    $region8: #{tpu_custom_call.1} parent=1 // pred_region
      %s30 = sadd.s32 0, 0
      %p31 = scmp.lt.s32.totalorder %s30, 0
      %s32 = scalar_select %p31, %s30, 0
      %s33 = smul.u32 2, %s32
      %s35 = ssub.s32 256, 256
      %36 = vsyncadd [#allocation8], %s35
      %s37 = smul.addr %s33, 128
      %s38 = scalar_lea.hbm %s1, %s37
      %s39 = sshll.u32 [#allocation7], 4
      %s40 = int_to_ptr.vmem [resolvable:$true] %s39
      %45 = dma.hbm_to_vmem [thread:$0]  %s38, 256, %s40, [#allocation8], 128, 128, 8
    $region9: #{tpu_custom_call.1} parent=1 // pred_fallthru
      _
    // Predicated region
    $region10: #{tpu_custom_call.1} parent=1 // pred_check
      _
    $region11: #{tpu_custom_call.1} parent=1 // pred_check_branch
      %47 = sbr.rel (0) target = $region13
    $region12: #{tpu_custom_call.1} parent=1 // pred_region
      %48 = dma.done [#allocation5], 256
    $region13: #{tpu_custom_call.1} parent=1 // pred_fallthru
      _
    // Predicated region
    $region14: #{tpu_custom_call.1} parent=1 // pred_check
      _
    $region15: #{tpu_custom_call.1} parent=1 // pred_check_branch
      %50 = sbr.rel (0) target = $region17
    $region16: #{tpu_custom_call.1} parent=1 // pred_region
      %51 = dma.done [#allocation8], 256
    $region17: #{tpu_custom_call.1} parent=1 // pred_fallthru
      _
    %s52 = sadd.s32 0, 0
    %p53 = scmp.lt.s32.totalorder %s52, 0
    %s54 = scalar_select %p53, %s52, 0
    %s55 = smul.u32 2, %s54
    %s56 = sadd.s32 0, 0
    %p57 = scmp.lt.s32.totalorder %s56, 0
    %s58 = scalar_select %p57, %s56, 0
    %s59 = smul.u32 2, %s58
    %p60 = scmp.eq.s32.totalorder 0, 0
    // Predicated region
    $region18: #{tpu_custom_call.1} parent=1 // pred_check
      %p61 = pneg %p60
    $region19: #{tpu_custom_call.1} parent=1 // pred_check_branch
      %63 = sbr.rel (%p61) target = $region21
    $region20: #{tpu_custom_call.1} parent=1 // pred_region
      %64 = vst [vmem:[#allocation2] sm:$0x1] 0.0
      %65 = vst [vmem:[#allocation3] sm:$0x1] 0.0
    $region21: #{tpu_custom_call.1} parent=1 // pred_fallthru
      _
    %v66 = vld [vmem:[#allocation4] sm:$0xff]
    %v67 = vld [vmem:[#allocation4 + $0x8] sm:$0xff]
    %v68 = vld [vmem:[#allocation7] sm:$0xff]
    %v69 = vld [vmem:[#allocation7 + $0x8] sm:$0xff]
    %v70 = vld [vmem:[#allocation2] sm:$0x1]
    %v71 = vmul.f32 %v66, %v68
    %v72 = vmul.f32 %v67, %v69
    %v73 = vadd.f32 %v71, %v72
    %v74 = vrot.slane %v73, 4
    %v75 = vadd.f32 %v73, %v74
    %v76 = vrot.slane %v75, 2
    %v77 = vadd.f32 %v75, %v76
    %v78 = vrot.slane %v77, 1
    %v79 = vadd.f32 %v77, %v78
    %v80 = vadd.f32 %v70, %v79
    %81 = vst [vmem:[#allocation2] sm:$0x1] %v80
    %v82 = vld [vmem:[#allocation3] sm:$0x1]
    %v83 = vadd.f32 %v66, %v68
    %v84 = vadd.f32 %v67, %v69
    %v85 = vadd.f32 %v83, %v84
    %v86 = vrot.slane %v85, 4
    %v87 = vadd.f32 %v85, %v86
    %v88 = vrot.slane %v87, 2
    %v89 = vadd.f32 %v87, %v88
    %v90 = vrot.slane %v89, 1
    %v91 = vadd.f32 %v89, %v90
    %v92 = vadd.f32 %v82, %v91
    %93 = vst [vmem:[#allocation3] sm:$0x1] %v92
    // Predicated region
    $region22: #{tpu_custom_call.1} parent=1 // pred_check
      %p94 = pneg %p60
    $region23: #{tpu_custom_call.1} parent=1 // pred_check_branch
      %96 = sbr.rel (%p94) target = $region25
    $region24: #{tpu_custom_call.1} parent=1 // pred_region
      %v97 = vld [vmem:[#allocation2] sm:$0x1]
      %vm98 = vcmask 1040384
      %v99 = vsel %vm98, %v97, 0.0
      %100 = vadd.xlane.f32.xlu0 %v99
      %v101 = vpop.xlane.xlu0 %100
      %v102 = vrot.slane %v101, 4
      %v103 = vadd.f32 %v101, %v102
      %v104 = vrot.slane %v103, 2
      %v105 = vadd.f32 %v103, %v104
      %v106 = vrot.slane %v105, 1
      %v107 = vadd.f32 %v105, %v106
      %s108 = vtos %v107
      %s109 = scalar_lea.smem [#allocation9], 0
      %110 = sst [smem:[%s109]] %s108
      %v111 = vld [vmem:[#allocation3] sm:$0x1]
      %v112 = vsel %vm98, %v111, 0.0
      %113 = vadd.xlane.f32.xlu0 %v112
      %v114 = vpop.xlane.xlu0 %113
      %v115 = vrot.slane %v114, 4
      %v116 = vadd.f32 %v114, %v115
      %v117 = vrot.slane %v116, 2
      %v118 = vadd.f32 %v116, %v117
      %v119 = vrot.slane %v118, 1
      %v120 = vadd.f32 %v118, %v119
      %s121 = vtos %v120
      %s122 = scalar_lea.smem [#allocation9], 1
      %123 = sst [smem:[%s122]] %s121
    $region25: #{tpu_custom_call.1} parent=1 // pred_fallthru
      _
    // Predicated region
    $region26: #{tpu_custom_call.1} parent=1 // pred_check
      _
    $region27: #{tpu_custom_call.1} parent=1 // pred_check_branch
      %125 = sbr.rel (0) target = $region29
    $region28: #{tpu_custom_call.1} parent=1 // pred_region
      %s127 = ssub.s32 16, 16
      %128 = vsyncadd [#allocation6], %s127
      %131 = dma.smem_to_hbm [#allocation9], 16, %s2, [#allocation6]
    $region29: #{tpu_custom_call.1} parent=1 // pred_fallthru
      _
    // Predicated region
    $region30: #{tpu_custom_call.1} parent=1 // pred_check
      _
    $region31: #{tpu_custom_call.1} parent=1 // pred_check_branch
      %133 = sbr.rel (0) target = $region33
    $region32: #{tpu_custom_call.1} parent=1 // pred_region
      %134 = dma.done [#allocation6], 16
    $region33: #{tpu_custom_call.1} parent=1 // pred_fallthru
      _
    %135 = sfence
    %136 = vsyncpa [#allocation5], 1
    %137 = vsyncpa [#allocation8], 1
    %138 = vsyncpa [#allocation6], 1

</llo_original>
